<compile_context>
chip_gen: v7x
topology: tpu7x:2x2x1
jax: 0.10.0
libtpu: 0.0.40
codegen_flags: <defaults>
</compile_context>

<pallas_src>
import functools
import numpy as np
import jax
import jax.numpy as jnp
from jax import lax
from jax.experimental import pallas as pl
from jax.experimental.pallas import tpu as pltpu

INF = 1000000.0
COMPUTE_DTYPE = jnp.bfloat16     # MXU operand / inter-kernel activation dtype


# ----------------------------------------------------------------------------- #
# Row-tiled dense:  out = x @ w + b   (w already bf16, out bf16 by default)
# ----------------------------------------------------------------------------- #
def _dense_kernel(x_ref, w_ref, b_ref, o_ref):
    acc = jnp.dot(x_ref[...].astype(COMPUTE_DTYPE), w_ref[...],
                  preferred_element_type=jnp.float32) + b_ref[...]
    o_ref[...] = acc.astype(o_ref.dtype)


def dense(x, w, b, *, out_dtype=COMPUTE_DTYPE, block_rows=1024):
    n, d_in = x.shape
    d_out = w.shape[1]
    tm = min(block_rows, n)
    return pl.pallas_call(
        _dense_kernel,
        out_shape=jax.ShapeDtypeStruct((n, d_out), out_dtype),
        grid=(pl.cdiv(n, tm),),
        in_specs=[
            pl.BlockSpec((tm, d_in), lambda i: (i, 0)),
            pl.BlockSpec((d_in, d_out), lambda i: (0, 0)),   # resident weight
            pl.BlockSpec((1, d_out), lambda i: (0, 0)),      # resident bias
        ],
        out_specs=pl.BlockSpec((tm, d_out), lambda i: (i, 0)),
        compiler_params=pltpu.CompilerParams(dimension_semantics=("parallel",)),
    )(x, w, b)


# ----------------------------------------------------------------------------- #
# Fused QKV projection (one MXU matmul, one pass over the hidden states)
# ----------------------------------------------------------------------------- #
def _qkv_kernel(x_ref, w_ref, b_ref, q_ref, k_ref, v_ref):
    acc = jnp.dot(x_ref[...].astype(COMPUTE_DTYPE), w_ref[...],
                  preferred_element_type=jnp.float32) + b_ref[...]
    hd = q_ref.shape[1]
    q_ref[...] = acc[:, :hd].astype(q_ref.dtype)
    k_ref[...] = acc[:, hd:2 * hd].astype(k_ref.dtype)
    v_ref[...] = acc[:, 2 * hd:].astype(v_ref.dtype)


def qkv_project(x, w_qkv, b_qkv, hd, *, block_rows=1024):
    n, d_in = x.shape
    tm = min(block_rows, n)
    out = jax.ShapeDtypeStruct((n, hd), COMPUTE_DTYPE)
    out_spec = pl.BlockSpec((tm, hd), lambda i: (i, 0))
    return pl.pallas_call(
        _qkv_kernel,
        out_shape=(out, out, out),
        grid=(pl.cdiv(n, tm),),
        in_specs=[
            pl.BlockSpec((tm, d_in), lambda i: (i, 0)),
            pl.BlockSpec((d_in, 3 * hd), lambda i: (0, 0)),
            pl.BlockSpec((1, 3 * hd), lambda i: (0, 0)),
        ],
        out_specs=(out_spec, out_spec, out_spec),
        compiler_params=pltpu.CompilerParams(dimension_semantics=("parallel",)),
    )(x, w_qkv, b_qkv)


# ----------------------------------------------------------------------------- #
# Fused output projection + residual + LayerNorm
# ----------------------------------------------------------------------------- #
def _post_ln_kernel(eps, x_ref, res_ref, w_ref, b_ref, g_ref, beta_ref, o_ref):
    attn_out = jnp.dot(x_ref[...].astype(COMPUTE_DTYPE), w_ref[...],
                       preferred_element_type=jnp.float32) + b_ref[...]
    h = attn_out + res_ref[...]
    mean = jnp.mean(h, axis=-1, keepdims=True)
    var = jnp.mean(jnp.square(h - mean), axis=-1, keepdims=True)
    o_ref[...] = ((h - mean) * lax.rsqrt(var + eps) * g_ref[...]
                  + beta_ref[...]).astype(o_ref.dtype)


def post_proj_ln(attn_vec, residual, w, b, gamma, beta, eps, *, block_rows=1024):
    n, hd = attn_vec.shape
    d = w.shape[1]
    tm = min(block_rows, n)
    return pl.pallas_call(
        functools.partial(_post_ln_kernel, eps),
        out_shape=jax.ShapeDtypeStruct((n, d), jnp.float32),
        grid=(pl.cdiv(n, tm),),
        in_specs=[
            pl.BlockSpec((tm, hd), lambda i: (i, 0)),
            pl.BlockSpec((tm, d), lambda i: (i, 0)),
            pl.BlockSpec((hd, d), lambda i: (0, 0)),
            pl.BlockSpec((1, d), lambda i: (0, 0)),
            pl.BlockSpec((1, d), lambda i: (0, 0)),
            pl.BlockSpec((1, d), lambda i: (0, 0)),
        ],
        out_specs=pl.BlockSpec((tm, d), lambda i: (i, 0)),
        compiler_params=pltpu.CompilerParams(dimension_semantics=("parallel",)),
    )(attn_vec, residual, w, b, gamma, beta)


# ----------------------------------------------------------------------------- #
# Attention core: grid=(B, head_groups), lane-dense blocks, fused score matmuls
# ----------------------------------------------------------------------------- #
def _roll_left_lanes(x, amt):
    m = x.shape[-1]
    if m % 128 == 0:
        # XLU rotate (matches np.roll: positive shift moves elements right,
        # so a left roll by `amt` is a right roll by m - amt).
        return pltpu.roll(x, m - amt, axis=1)
    # tiny / lane-unaligned fallback (demo shapes)
    return jnp.concatenate([x[:, amt:], x[:, :amt]], axis=1)


def _attn_kernel(shift, heads, d_head,
                 q_ref, k_ref, v_ref, rseg_ref, qb_ref,
                 ttm_ref, am_ref, cls_ref, o_ref):
    S = q_ref.shape[0]
    C = k_ref.shape[0]
    M = rseg_ref.shape[0] - 2

    k = k_ref[...]                                     # (C, hg*Dh) bf16
    v = v_ref[...]                                     # (C, hg*Dh) bf16
    rseg = rseg_ref[...]                               # (M+2, hg*Dh) bf16
    # Append the (pre-scaled) r_w / r_r / r_s bias rows to q: their matmul rows
    # become the rank-1 bias corrections (no full-size qw/qr/qs temporaries).
    q_aug = jnp.concatenate([q_ref[...], qb_ref[...]], axis=0)   # (S+3, hg*Dh)

    # Head-invariant mask material (f32 math).
    ttm_same = ttm_ref[0] > 0.5                        # (S, C) bool
    clsm = cls_ref[...].astype(jnp.float32)            # (S, C)
    mask_bias = jnp.where(am_ref[0] > 0.5, 0.0, -INF)  # (1, C) additive mask

    # Relative-shift gather: row i of the positional scores is rolled LEFT by
    # shift*(S - i) and the first C columns kept (valid iff shift*S + C <= M).
    # The row-dependent roll is decomposed into its binary digits: log2 uniform
    # rolls + per-row selects with (S, 1) lane-broadcast masks.
    row = lax.broadcasted_iota(jnp.int32, (S, 1), 0)
    lroll = shift * (S - row)                          # (S, 1) int32
    nbits = max(1, int(shift * S).bit_length())
    bit_masks = [(lroll & (1 << bit)) != 0 for bit in range(nbits)]

    dn = (((1,), (1,)), ((), ()))                      # contract minor dims: A @ B.T
    outs = []
    for h in range(heads):
        sl = slice(h * d_head, (h + 1) * d_head)
        q_h = q_aug[:, sl]                             # (S+3, Dh)

        # Two fused MXU passes per head (content; positional+token-type).
        big_k = lax.dot_general(q_h, k[:, sl], dn,
                                preferred_element_type=jnp.float32)     # (S+3, C)
        big_rs = lax.dot_general(q_h, rseg[:, sl], dn,
                                 preferred_element_type=jnp.float32)    # (S+3, M+2)

        content = big_k[:S, :] + big_k[S:S + 1, :]                       # + b_w @ k.T
        pos_full = big_rs[:S, :M] + big_rs[S + 1:S + 2, :M]              # + b_r @ r.T
        tt = big_rs[:S, M:] + big_rs[S + 2:S + 3, M:]                    # (S, 2)

        for bit in range(nbits):
            amt = 1 << bit
            pos_full = jnp.where(bit_masks[bit],
                                 _roll_left_lanes(pos_full, amt), pos_full)
        pos = pos_full[:, :C]                                            # (S, C)

        tt_attn = jnp.where(ttm_same, tt[:, 1:2], tt[:, 0:1])           # (S, C)

        score = content + (pos + tt_attn) * clsm + mask_bias
        score = score - jnp.max(score, axis=-1, keepdims=True)
        p = jnp.exp(score)
        p = p * pl.reciprocal(jnp.sum(p, axis=-1, keepdims=True), approx=True)

        out_h = jnp.dot(p.astype(COMPUTE_DTYPE), v[:, sl],
                        preferred_element_type=jnp.float32)              # (S, Dh)
        outs.append(out_h.astype(o_ref.dtype))

    # Single full-width (lane-dense) store for the whole head group.
    o_ref[...] = jnp.concatenate(outs, axis=1) if heads > 1 else outs[0]


def _pick_heads_per_step(n_head, d_head):
    # Smallest head group whose lane width is a multiple of 128 (lane-dense
    # blocks & stores, more grid steps for megacore/pipelining, bounded live
    # ranges per step on v7x); otherwise all heads (block equals the full lane
    # extent, which is always a legal BlockSpec).
    for hg in range(1, n_head):
        if n_head % hg == 0 and (hg * d_head) % 128 == 0:
            return hg
    return n_head


def attention_core(q, k, v, rseg, qbias, ttm, am, clsm, *,
                   batch, n_head, d_head, shift, heads_per_step=None):
    bs, hd_total = q.shape
    s = bs // batch
    c = k.shape[0] // batch
    m2 = rseg.shape[0]                               # M + 2
    if heads_per_step is None:
        heads_per_step = _pick_heads_per_step(n_head, d_head)
    hg = heads_per_step
    ghd = hg * d_head
    n_groups = n_head // hg

    kernel = functools.partial(_attn_kernel, shift, hg, d_head)

    # Explicit VMEM budget from the actual block sizes (double-buffered blocks
    # + f32 score temporaries + headroom), clamped to the v7x physical limit.
    blk = ((s + 3) * ghd + 2 * c * ghd + m2 * ghd + 3 * ghd
           + s * c + c + s * c + s * ghd) * 2                   # bf16 bytes
    est = 2 * blk + 3 * (s + 8) * (c + m2) * 4 + (8 << 20)
    vmem_limit = int(min(max(est, 32 << 20), 64 << 20))

    return pl.pallas_call(
        kernel,
        out_shape=jax.ShapeDtypeStruct((bs, hd_total), COMPUTE_DTYPE),
        grid=(batch, n_groups),
        in_specs=[
            pl.BlockSpec((s, ghd), lambda b, g: (b, g)),        # q
            pl.BlockSpec((c, ghd), lambda b, g: (b, g)),        # k
            pl.BlockSpec((c, ghd), lambda b, g: (b, g)),        # v
            pl.BlockSpec((m2, ghd), lambda b, g: (0, g)),       # [r_head; seg_embed]
            pl.BlockSpec((3, ghd), lambda b, g: (0, g)),        # r_w/r_r/r_s * scale
            pl.BlockSpec((1, s, c), lambda b, g: (b, 0, 0)),    # token_type_mat (bf16)
            pl.BlockSpec((1, 1, c), lambda b, g: (b, 0, 0)),    # attention_mask (bf16)
            pl.BlockSpec((s, c), lambda b, g: (0, 0)),          # cls_mask (bf16, resident)
        ],
        out_specs=pl.BlockSpec((s, ghd), lambda b, g: (b, g)),
        compiler_params=pltpu.CompilerParams(
            dimension_semantics=("parallel", "parallel"),
            vmem_limit_bytes=vmem_limit),
    )(q, k, v, rseg, qbias, ttm, am, clsm)


# ----------------------------------------------------------------------------- #
# One-time parameter preparation (hoisted out of the forward path)
# ----------------------------------------------------------------------------- #
def prepare_params(params, *, n_head, d_head):
    H, Dh = n_head, d_head
    HD = H * Dh
    D = params["q_w"].shape[0]
    scale = 1.0 / (d_head ** 0.5)

    q_w = params["q_w"] * scale                                  # fold 1/sqrt(d_head)
    w_qkv = jnp.concatenate([q_w, params["k_w"], params["v_w"]],
                            axis=1).astype(COMPUTE_DTYPE)
    b_qkv = jnp.concatenate([jnp.zeros((1, HD), jnp.float32),
                             params["k_b"].reshape(1, HD),
                             params["v_b"].reshape(1, HD)], axis=1)
    qbias = (jnp.concatenate([params["r_w_bias"].reshape(1, HD),
                              params["r_r_bias"].reshape(1, HD),
                              params["r_s_bias"].reshape(1, HD)], axis=0)
             * scale).astype(COMPUTE_DTYPE)
    return dict(
        w_qkv=w_qkv, b_qkv=b_qkv,
        q_w=q_w.astype(COMPUTE_DTYPE),
        k_w=params["k_w"].astype(COMPUTE_DTYPE), k_b=params["k_b"].reshape(1, HD),
        v_w=params["v_w"].astype(COMPUTE_DTYPE), v_b=params["v_b"].reshape(1, HD),
        r_kernel=params["r_kernel"].reshape(D, HD).astype(COMPUTE_DTYPE),
        seg_embed=params["seg_embed"].reshape(2, HD).astype(COMPUTE_DTYPE),
        qbias=qbias,
        post_w=params["post_w"].astype(COMPUTE_DTYPE),
        post_b=params["post_b"].reshape(1, D),
        ln_g=params["ln_g"].reshape(1, D), ln_b=params["ln_b"].reshape(1, D),
        zeros_hd=jnp.zeros((1, HD), jnp.float32),
    )


# ----------------------------------------------------------------------------- #
# Wrapper: full FunnelRelMultiheadAttention forward (eval mode)
# ----------------------------------------------------------------------------- #
def funnel_rel_attention(query, key, value, prep, r, token_type_mat,
                         attention_mask, cls_mask, *, n_head, d_head,
                         layer_norm_eps=1e-9, fused_qkv=None):
    B, S, D = query.shape
    C = key.shape[1]
    H, Dh = n_head, d_head
    HD = H * Dh
    M = r.shape[0]
    shift = 2 if S != C else 1
    # The per-row gather stays inside one row of (q+r_r)@r_head.T iff
    # shift*S + C <= M (holds for Funnel's position-embedding lengths).
    assert shift * S + C <= M, "relative-shift bound violated: shift*S + C > M"

    if fused_qkv is None:
        # NOTE: identity gating only; pass fused_qkv=True explicitly for
        # equal-but-distinct self-attention inputs.
        fused_qkv = (query is key) and (key is value)

    if fused_qkv:
        q_head, k_head, v_head = qkv_project(
            query.reshape(B * S, D), prep["w_qkv"], prep["b_qkv"], HD)
    else:
        q_head = dense(query.reshape(B * S, D), prep["q_w"], prep["zeros_hd"])
        k_head = dense(key.reshape(B * C, D), prep["k_w"], prep["k_b"])
        v_head = dense(value.reshape(B * C, D), prep["v_w"], prep["v_b"])

    # r_head = einsum('td,dnh->tnh', r, r_kernel), lane-dense (M, H*Dh) bf16,
    # with seg_embed appended so positional + token-type share one MXU pass.
    r_head = dense(r, prep["r_kernel"], prep["zeros_hd"])
    rseg = jnp.concatenate([r_head, prep["seg_embed"]], axis=0)   # (M+2, HD) bf16

    attn_vec = attention_core(
        q_head, k_head, v_head, rseg, prep["qbias"],
        token_type_mat.astype(COMPUTE_DTYPE),
        attention_mask.astype(COMPUTE_DTYPE).reshape(B, 1, C),
        cls_mask.astype(COMPUTE_DTYPE),
        batch=B, n_head=H, d_head=Dh, shift=shift)                # (B*S, HD) bf16

    out = post_proj_ln(attn_vec, query.reshape(B * S, D),
                       prep["post_w"], prep["post_b"],
                       prep["ln_g"], prep["ln_b"], layer_norm_eps)
    return out.reshape(B, S, D)


# ----------------------------------------------------------------------------- #
# Pure-JAX reference (mirrors the PyTorch/mindspore code incl. _relative_shift_gather)
# ----------------------------------------------------------------------------- #
def reference(query, key, value, params, r, token_type_mat, attention_mask,
              cls_mask, *, n_head, d_head, layer_norm_eps=1e-9):
    B, S, D = query.shape
    C = key.shape[1]
    scale = 1.0 / (d_head ** 0.5)

    q_head = (query.reshape(-1, D) @ params["q_w"]).reshape(B, S, n_head, d_head)
    k_head = (key.reshape(-1, D) @ params["k_w"] + params["k_b"]).reshape(B, C, n_head, d_head)
    v_head = (value.reshape(-1, D) @ params["v_w"] + params["v_b"]).reshape(B, C, n_head, d_head)

    q_head = q_head * scale
    content = jnp.einsum("bind,bjnd->bnij", q_head + params["r_w_bias"] * scale, k_head)

    shift = 2 if S != C else 1
    r_head = jnp.einsum("td,dnh->tnh", r, params["r_kernel"])
    pos = jnp.einsum("binh,tnh->bnit", q_head + params["r_r_bias"] * scale, r_head)
    M = pos.shape[-1]
    pos = pos.reshape(B, n_head, M, S)[:, :, shift:, :]
    pos = pos.reshape(B, n_head, S, M - shift)[..., :C]
    pos = pos * cls_mask

    tt_bias = jnp.einsum("bind,snd->bnis", q_head + params["r_s_bias"] * scale,
                         params["seg_embed"])
    ttm = jnp.broadcast_to(token_type_mat[:, None], (B, n_head, S, C)) > 0.5
    diff, same = tt_bias[..., :1], tt_bias[..., 1:]
    tt_attn = jnp.where(ttm, jnp.broadcast_to(same, ttm.shape),
                        jnp.broadcast_to(diff, ttm.shape)) * cls_mask

    score = content + pos + tt_attn
    score = score - INF * (1.0 - attention_mask[:, None, None].astype(jnp.float32))
    prob = jax.nn.softmax(score, axis=-1)
    attn_vec = jnp.einsum("bnij,bjnd->bind", prob, v_head)
    attn_out = attn_vec.reshape(B, S, n_head * d_head) @ params["post_w"] + params["post_b"]

    x = query + attn_out
    mean = x.mean(-1, keepdims=True)
    var = ((x - mean) ** 2).mean(-1, keepdims=True)
    return (x - mean) / jnp.sqrt(var + layer_norm_eps) * params["ln_g"] + params["ln_b"]


# ----------------------------------------------------------------------------- #
if __name__ == "__main__":
    # small shapes consistent with the module (bf16-tile-aligned on sublanes)
    B, S, D, H, Dh = 2, 16, 32, 4, 8     # d_model=32, n_head=4, d_head=8
    C = S                                # self-attention block (shift = 1)
    M = 2 * S                            # relative-position embedding length
    eps = 1e-9

    key0 = jax.random.PRNGKey(0)
    ks = jax.random.split(key0, 20)

    def rnd(k, shape, s=0.05):
        return (s * jax.random.normal(k, shape)).astype(jnp.float32)

    params = {
        "q_w": rnd(ks[0], (D, H * Dh)),
        "k_w": rnd(ks[1], (D, H * Dh)),
        "k_b": rnd(ks[2], (1, H * Dh)),
        "v_w": rnd(ks[3], (D, H * Dh)),
        "v_b": rnd(ks[4], (1, H * Dh)),
        "r_w_bias": rnd(ks[5], (H, Dh)),
        "r_r_bias": rnd(ks[6], (H, Dh)),
        "r_s_bias": rnd(ks[7], (H, Dh)),
        "r_kernel": rnd(ks[8], (D, H, Dh)),
        "seg_embed": rnd(ks[9], (2, H, Dh)),
        "post_w": rnd(ks[10], (H * Dh, D)),
        "post_b": rnd(ks[11], (1, D)),
        "ln_g": (1.0 + rnd(ks[12], (1, D))).astype(jnp.float32),
        "ln_b": rnd(ks[13], (1, D)),
    }

    query = rnd(ks[14], (B, S, D), s=1.0)
    keyt = query
    value = query
    r = rnd(ks[15], (M, D), s=1.0)       # position_embeds[block_index][shift-1]
    token_type_mat = (jax.random.uniform(ks[16], (B, S, C)) > 0.5).astype(jnp.float32)
    attention_mask = jnp.ones((B, C), jnp.float32).at[1, -2:].set(0.0)
    # separate_cls style mask: zeros on first row / first column
    cls_mask = jnp.zeros((S, C), jnp.float32).at[1:, 1:].set(1.0)

    prep = prepare_params(params, n_head=H, d_head=Dh)   # one-time, off the hot path

    out = funnel_rel_attention(query, keyt, value, prep, r, token_type_mat,
                               attention_mask, cls_mask, n_head=H, d_head=Dh,
                               layer_norm_eps=eps)
    out = jax.block_until_ready(out)

    ref = reference(query, keyt, value, params, r, token_type_mat, attention_mask,
                    cls_mask, n_head=H, d_head=Dh, layer_norm_eps=eps)
    # tolerance accounts for bf16 MXU operands / bf16 inter-kernel activations
    # (f32 accumulation) and the approximate softmax reciprocal; softmax and
    # LayerNorm math stays in f32.
    np.testing.assert_allclose(np.asarray(out), np.asarray(ref), rtol=6e-3, atol=6e-3)

    print("KERNEL_OK")
</pallas_src>

<mosaic_0001>
module attributes {stable_mosaic.version = 11 : i64} {
  func.func @_qkv_kernel(%arg0: i32, %arg1: memref<32x32xf32, #tpu.memory_space<vmem>>, %arg2: memref<32x96xbf16, #tpu.memory_space<vmem>>, %arg3: memref<1x96xf32, #tpu.memory_space<vmem>>, %arg4: memref<32x32xbf16, #tpu.memory_space<vmem>>, %arg5: memref<32x32xbf16, #tpu.memory_space<vmem>>, %arg6: memref<32x32xbf16, #tpu.memory_space<vmem>>) attributes {dimension_semantics = [#tpu.dimension_semantics<parallel>], iteration_bounds = array<i64: 1>, scalar_prefetch = 0 : i64, scratch_operands = 0 : i64, tpu.core_type = #tpu.core_type<tc>, window_params = [{transform_indices = @transform_0, window_bounds = array<i64: 32, 32>}, {pipeline_mode = #tpu.pipeline_mode<synchronous>, transform_indices = @transform_1, window_bounds = array<i64: 32, 96>}, {pipeline_mode = #tpu.pipeline_mode<synchronous>, transform_indices = @transform_2, window_bounds = array<i64: 1, 96>}, {transform_indices = @transform_3, window_bounds = array<i64: 32, 32>}, {transform_indices = @transform_4, window_bounds = array<i64: 32, 32>}, {transform_indices = @transform_5, window_bounds = array<i64: 32, 32>}]} {
    %c0 = arith.constant 0 : index
    %c0_0 = arith.constant 0 : index
    %0 = vector.load %arg1[%c0, %c0_0] : memref<32x32xf32, #tpu.memory_space<vmem>>, vector<32x32xf32>
    %1 = arith.truncf %0 : vector<32x32xf32> to vector<32x32xbf16>
    %c0_1 = arith.constant 0 : index
    %c0_2 = arith.constant 0 : index
    %2 = vector.load %arg2[%c0_1, %c0_2] : memref<32x96xbf16, #tpu.memory_space<vmem>>, vector<32x96xbf16>
    %cst = arith.constant dense<0.000000e+00> : vector<32x96xf32>
    %3 = tpu.matmul %1, %2, %cst {dimension_numbers = #tpu.dot_dimension_numbers<[1], [0], [0], [1], [0, 0, 1, 1], [], []>} : vector<32x32xbf16>, vector<32x96xbf16>, vector<32x96xf32> -> vector<32x96xf32>
    %c0_3 = arith.constant 0 : index
    %c0_4 = arith.constant 0 : index
    %4 = vector.load %arg3[%c0_3, %c0_4] : memref<1x96xf32, #tpu.memory_space<vmem>>, vector<1x96xf32>
    %5 = vector.broadcast %4 : vector<1x96xf32> to vector<32x96xf32>
    %6 = arith.addf %3, %5 : vector<32x96xf32>
    %7 = vector.extract_strided_slice %6 {offsets = [0, 0], sizes = [32, 32], strides = [1, 1]} : vector<32x96xf32> to vector<32x32xf32>
    %8 = arith.truncf %7 : vector<32x32xf32> to vector<32x32xbf16>
    %c0_5 = arith.constant 0 : index
    %c0_6 = arith.constant 0 : index
    %9 = vector.load %arg4[%c0_5, %c0_6] : memref<32x32xbf16, #tpu.memory_space<vmem>>, vector<32x32xbf16>
    tpu.vector_store %arg4[%c0_5, %c0_6], %8 {strides = array<i32>} : memref<32x32xbf16, #tpu.memory_space<vmem>>, vector<32x32xbf16>,
    %10 = vector.extract_strided_slice %6 {offsets = [0, 32], sizes = [32, 32], strides = [1, 1]} : vector<32x96xf32> to vector<32x32xf32>
    %11 = arith.truncf %10 : vector<32x32xf32> to vector<32x32xbf16>
    %c0_7 = arith.constant 0 : index
    %c0_8 = arith.constant 0 : index
    %12 = vector.load %arg5[%c0_7, %c0_8] : memref<32x32xbf16, #tpu.memory_space<vmem>>, vector<32x32xbf16>
    tpu.vector_store %arg5[%c0_7, %c0_8], %11 {strides = array<i32>} : memref<32x32xbf16, #tpu.memory_space<vmem>>, vector<32x32xbf16>,
    %13 = vector.extract_strided_slice %6 {offsets = [0, 64], sizes = [32, 32], strides = [1, 1]} : vector<32x96xf32> to vector<32x32xf32>
    %14 = arith.truncf %13 : vector<32x32xf32> to vector<32x32xbf16>
    %c0_9 = arith.constant 0 : index
    %c0_10 = arith.constant 0 : index
    %15 = vector.load %arg6[%c0_9, %c0_10] : memref<32x32xbf16, #tpu.memory_space<vmem>>, vector<32x32xbf16>
    tpu.vector_store %arg6[%c0_9, %c0_10], %14 {strides = array<i32>} : memref<32x32xbf16, #tpu.memory_space<vmem>>, vector<32x32xbf16>,
    return
  }
  func.func @transform_0(%arg0: i32) -> (i32, i32) {
    %c0_i32 = arith.constant 0 : i32
    %c0_i32_0 = arith.constant 0 : i32
    return %arg0, %c0_i32 : i32, i32
  }
  func.func @transform_1(%arg0: i32) -> (i32, i32) {
    %c0_i32 = arith.constant 0 : i32
    %c0_i32_0 = arith.constant 0 : i32
    %c0_i32_1 = arith.constant 0 : i32
    return %c0_i32, %c0_i32_0 : i32, i32
  }
  func.func @transform_2(%arg0: i32) -> (i32, i32) {
    %c0_i32 = arith.constant 0 : i32
    %c0_i32_0 = arith.constant 0 : i32
    %c0_i32_1 = arith.constant 0 : i32
    return %c0_i32, %c0_i32_0 : i32, i32
  }
  func.func @transform_3(%arg0: i32) -> (i32, i32) {
    %c0_i32 = arith.constant 0 : i32
    %c0_i32_0 = arith.constant 0 : i32
    return %arg0, %c0_i32 : i32, i32
  }
  func.func @transform_4(%arg0: i32) -> (i32, i32) {
    %c0_i32 = arith.constant 0 : i32
    %c0_i32_0 = arith.constant 0 : i32
    return %arg0, %c0_i32 : i32, i32
  }
  func.func @transform_5(%arg0: i32) -> (i32, i32) {
    %c0_i32 = arith.constant 0 : i32
    %c0_i32_0 = arith.constant 0 : i32
    return %arg0, %c0_i32 : i32, i32
  }
}

</mosaic_0001>

<llo_original>
// kernel: tpu_custom_call.1
$region0: #{tpu_custom_call.1}
  #allocation0 [shape = 'u32[]', space=smem, size = 0x4, offset = 0x4, fixed_abs, tag = 'smem constant byte address 0x4 - core index']
  #allocation1 [shape = 'u32[144,128]{1,0:T(1,128)}', space=vmem, size = 0x12000, scoped, tag = 'internal scratch']
  %s0 = inlined_call_operand.hbm [shape: f32[32,32], index: 0, kind: input, shape index: {}]
  %s1 = inlined_call_operand.hbm [shape: bf16[32,96], index: 1, kind: input, shape index: {}]
  %s2 = inlined_call_operand.vmem [shape: f32[1,96], index: 2, kind: input, shape index: {}]
  %s3 = inlined_call_operand.hbm [shape: bf16[32,32], index: 3, kind: output, shape index: {0}]
  %s4 = inlined_call_operand.hbm [shape: bf16[32,32], index: 4, kind: output, shape index: {1}]
  %s5 = inlined_call_operand.hbm [shape: bf16[32,32], index: 5, kind: output, shape index: {2}]
  %6 = xla_tuple %s3, %s4, %s5
  %s7 = sld [smem:[#allocation0]]
  $region46: #{tpu_custom_call.1} parent=0
    _
  %s9 = ssub.s32 1, %s7
  %s10 = scalar_select 0, %s9, %s7
  $region1: #{tpu_custom_call.1} parent=0
    #allocation2 [shape = 'u8[16384]{0}', space=vmem, size = 0x4000, scoped, tag = 'input window, operand 0, single buffered']
    #allocation3 [shape = 's32[1]{0}', space=sflag, size = 0x4, scoped, tag = 'scoped memory for tpu_custom_call.1']
    #allocation4 [shape = 's32[1]{0}', space=sflag, size = 0x4, scoped, tag = 'scoped memory for tpu_custom_call.1']
    #allocation5 [shape = 'u8[8192]{0}', space=vmem, size = 0x2000, scoped, tag = 'input window, operand 1, single buffered']
    #allocation6 [shape = 's32[1]{0}', space=sflag, size = 0x4, scoped, tag = 'scoped memory for tpu_custom_call.1']
    #allocation7 [shape = 'u8[8192]{0}', space=vmem, size = 0x2000, scoped, tag = 'output window, operand 0, single buffered']
    #allocation8 [shape = 'u8[8192]{0}', space=vmem, size = 0x2000, scoped, tag = 'output window, operand 1, single buffered']
    #allocation9 [shape = 's32[1]{0}', space=sflag, size = 0x4, scoped, tag = 'scoped memory for tpu_custom_call.1']
    #allocation10 [shape = 'u8[8192]{0}', space=vmem, size = 0x2000, scoped, tag = 'output window, operand 2, single buffered']
    %11 = vsyncpa [#allocation3], 0
    %12 = vsyncpa [#allocation6], 0
    %13 = vsyncpa [#allocation4], 0
    %14 = vsyncpa [#allocation9], 0
    // Predicated region
    $region2: #{tpu_custom_call.1} parent=1 // pred_check
      _
    $region3: #{tpu_custom_call.1} parent=1 // pred_check_branch
      %16 = sbr.rel (0) target = $region5
    $region4: #{tpu_custom_call.1} parent=1 // pred_region
      %s18 = ssub.s32 512, 512
      %19 = vsyncadd [#allocation3], %s18
      %s20 = sshll.u32 [#allocation2], 4
      %s21 = int_to_ptr.vmem [resolvable:$true] %s20
      %26 = dma.hbm_to_vmem [thread:$0]  %s0, 512, %s21, [#allocation3], 128, 128, 8
    $region5: #{tpu_custom_call.1} parent=1 // pred_fallthru
      _
    // Predicated region
    $region6: #{tpu_custom_call.1} parent=1 // pred_check
      _
    $region7: #{tpu_custom_call.1} parent=1 // pred_check_branch
      %28 = sbr.rel (0) target = $region9
    $region8: #{tpu_custom_call.1} parent=1 // pred_region
      %s30 = ssub.s32 256, 256
      %31 = vsyncadd [#allocation6], %s30
      %s32 = sshll.u32 [#allocation5], 4
      %s33 = int_to_ptr.vmem [resolvable:$true] %s32
      %38 = dma.hbm_to_vmem [thread:$0]  %s1, 256, %s33, [#allocation6], 64, 64, 4
    $region9: #{tpu_custom_call.1} parent=1 // pred_fallthru
      _
    // Predicated region
    $region10: #{tpu_custom_call.1} parent=1 // pred_check
      _
    $region11: #{tpu_custom_call.1} parent=1 // pred_check_branch
      %40 = sbr.rel (0) target = $region13
    $region12: #{tpu_custom_call.1} parent=1 // pred_region
      _
    $region13: #{tpu_custom_call.1} parent=1 // pred_fallthru
      _
    // Predicated region
    $region14: #{tpu_custom_call.1} parent=1 // pred_check
      _
    $region15: #{tpu_custom_call.1} parent=1 // pred_check_branch
      %42 = sbr.rel (0) target = $region17
    $region16: #{tpu_custom_call.1} parent=1 // pred_region
      %43 = dma.done [#allocation3], 512
    $region17: #{tpu_custom_call.1} parent=1 // pred_fallthru
      _
    // Predicated region
    $region18: #{tpu_custom_call.1} parent=1 // pred_check
      _
    $region19: #{tpu_custom_call.1} parent=1 // pred_check_branch
      %45 = sbr.rel (0) target = $region21
    $region20: #{tpu_custom_call.1} parent=1 // pred_region
      %46 = dma.done [#allocation6], 256
    $region21: #{tpu_custom_call.1} parent=1 // pred_fallthru
      _
    %v48 = vld [vmem:[#allocation2] sm:$0xff]
    %v49 = vld [vmem:[#allocation2 + $0x8] sm:$0xff]
    %v50 = vld [vmem:[#allocation2 + $0x10] sm:$0xff]
    %v51 = vld [vmem:[#allocation2 + $0x18] sm:$0xff]
    %v52 = vpack.c.bf16 %v49, %v48
    %v53 = vpack.c.bf16 %v51, %v50
    %v54 = vld [vmem:[#allocation5] sm:$0xf]
    %v55 = vld [vmem:[#allocation5 + $0x4] sm:$0xf]
    %v56 = vld [vmem:[#allocation5 + $0x8] sm:$0xf]
    %v57 = vld [vmem:[#allocation5 + $0xc] sm:$0xf]
    %v58 = vld [vmem:[%s2] sm:$0x1]
    %v60 = vlaneseq
    %v61 = vshrl.u32 %v60, 7
    %v62 = vsub.s32 0, %v61
    %v63 = vrot.slane %v58, %v62
    %v69 = vunpack.c.l.b16 %v54
    %v70 = vunpack.c.l.b16 %v55
    %v71 = vunpack.c.l.b16 %v56
    %v72 = vunpack.c.l.b16 %v57
    %v73 = vpack.c.b16 %v70, %v69
    %v74 = vpack.c.b16 %v72, %v71
    %vm77 = vcmask 261120
    %v79 = vsel %vm77, %v52, 0
    %v82 = vsel %vm77, %v53, 0
    %84 = vmatprep.subr.bf16.mxu0 0
    %85 = vmatpush1.bf16.msra.mxu0 %v73
    %86 = vmatprep.subr.bf16.mxu0 0
    %87 = vmatpush1.bf16.msra.mxu0 %v74
    %88 = vmatprep.subr.bf16.mxu0 0
    %89 = vmatpush1.bf16.msra.mxu0 0
    %90 = vmatprep.subr.bf16.mxu0 0
    %91 = vmatpush1.bf16.msra.mxu0 0
    %92 = vmatprep.subr.bf16.mxu0 0
    %93 = vmatpush1.bf16.msra.mxu0 0
    %94 = vmatprep.subr.bf16.mxu0 0
    %95 = vmatpush1.bf16.msra.mxu0 0
    %96 = vmatprep.subr.bf16.mxu0 0
    %97 = vmatpush1.bf16.msra.mxu0 0
    %98 = vmatprep.subr.bf16.mxu0 0
    %99 = vmatpush1.bf16.msra.mxu0 0
    %100 = vmatprep.subr.bf16.mxu0 0
    %101 = vmatpush1.bf16.msra.mxu0 0
    %102 = vmatprep.subr.bf16.mxu0 0
    %103 = vmatpush1.bf16.msra.mxu0 0
    %104 = vmatprep.subr.bf16.mxu0 0
    %105 = vmatpush1.bf16.msra.mxu0 0
    %106 = vmatprep.subr.bf16.mxu0 0
    %107 = vmatpush1.bf16.msra.mxu0 0
    %108 = vmatprep.subr.bf16.mxu0 0
    %109 = vmatpush1.bf16.msra.mxu0 0
    %110 = vmatprep.subr.bf16.mxu0 0
    %111 = vmatpush1.bf16.msra.mxu0 0
    %112 = vmatprep.subr.bf16.mxu0 0
    %113 = vmatpush1.bf16.msra.mxu0 0
    %114 = vmatprep.subr.bf16.mxu0 0
    %115 = vmatpush1.bf16.msra.mxu0 0
    %116 = vmatprep.mubr.bf16.mxu0 0
    %117 = vmatmul.mubr.bf16.gmra.mrb[0].mxu0 %v79
    %v118 = vpop.f32.mrb[0].mxu0
    %v119 = vadd.f32 %v63, %v118
    %v120 = vpop.f32.mrb[0].mxu0
    %v121 = vpop.f32.mrb[0].mxu0
    %v122 = vadd.f32 %v63, %v121
    %v123 = vpop.f32.mrb[0].mxu0
    %124 = vmatprep.mubr.bf16.mxu0 0
    %125 = vmatmul.mubr.bf16.gmra.mrb[0].mxu0 %v82
    %v126 = vpop.f32.mrb[0].mxu0
    %v127 = vadd.f32 %v63, %v126
    %v128 = vpop.f32.mrb[0].mxu0
    %v129 = vpop.f32.mrb[0].mxu0
    %v130 = vadd.f32 %v63, %v129
    %v131 = vpop.f32.mrb[0].mxu0
    %132 = vdwg.mxu0
    %v133 = vpack.c.bf16 %v122, %v119
    %v134 = vpack.c.bf16 %v130, %v127
    %v137 = vunpack.c.l.b16 %v133
    %v138 = vunpack.c.h.b16 %v133
    %v139 = vunpack.c.l.b16 %v134
    %v140 = vunpack.c.h.b16 %v134
    %v141 = vpack.c.b16 %v137, %v137
    %v142 = vpack.c.b16 %v138, %v138
    %v143 = vpack.c.b16 %v139, %v139
    %v144 = vpack.c.b16 %v140, %v140
    %vm149 = vcmask 257024
    %150 = vst.msk [vmem:[#allocation7] sm:$0xf] %vm149, %v141
    %151 = vst.msk [vmem:[#allocation7 + $0x4] sm:$0xf] %vm149, %v142
    %152 = vst.msk [vmem:[#allocation7 + $0x8] sm:$0xf] %vm149, %v143
    %153 = vst.msk [vmem:[#allocation7 + $0xc] sm:$0xf] %vm149, %v144
    %154 = vrot.lane.b32.xlu0 %v141, 96
    %v155 = vpop.permute.xlu0 %154
    %156 = vrot.lane.b32.xlu0 %v142, 96
    %v157 = vpop.permute.xlu0 %156
    %158 = vrot.lane.b32.xlu0 %v143, 96
    %v159 = vpop.permute.xlu0 %158
    %160 = vrot.lane.b32.xlu0 %v144, 96
    %v161 = vpop.permute.xlu0 %160
    %166 = vst.msk [vmem:[#allocation8] sm:$0xf] %vm149, %v155
    %167 = vst.msk [vmem:[#allocation8 + $0x4] sm:$0xf] %vm149, %v157
    %168 = vst.msk [vmem:[#allocation8 + $0x8] sm:$0xf] %vm149, %v159
    %169 = vst.msk [vmem:[#allocation8 + $0xc] sm:$0xf] %vm149, %v161
    %170 = vrot.lane.b32.xlu0 %v141, 64
    %v171 = vpop.permute.xlu0 %170
    %172 = vrot.lane.b32.xlu0 %v142, 64
    %v173 = vpop.permute.xlu0 %172
    %174 = vrot.lane.b32.xlu0 %v143, 64
    %v175 = vpop.permute.xlu0 %174
    %176 = vrot.lane.b32.xlu0 %v144, 64
    %v177 = vpop.permute.xlu0 %176
    %182 = vst.msk [vmem:[#allocation10] sm:$0xf] %vm149, %v171
    %183 = vst.msk [vmem:[#allocation10 + $0x4] sm:$0xf] %vm149, %v173
    %184 = vst.msk [vmem:[#allocation10 + $0x8] sm:$0xf] %vm149, %v175
    %185 = vst.msk [vmem:[#allocation10 + $0xc] sm:$0xf] %vm149, %v177
    // Predicated region
    $region22: #{tpu_custom_call.1} parent=1 // pred_check
      _
    $region23: #{tpu_custom_call.1} parent=1 // pred_check_branch
      %187 = sbr.rel (0) target = $region25
    $region24: #{tpu_custom_call.1} parent=1 // pred_region
      %s189 = ssub.s32 256, 256
      %190 = vsyncadd [#allocation4], %s189
      %s191 = sshll.u32 [#allocation7], 4
      %s192 = int_to_ptr.vmem [resolvable:$true] %s191
      %197 = dma.vmem_to_hbm [thread:$0]  %s192, 256, %s3, [#allocation4], 64, 64, 4
    $region25: #{tpu_custom_call.1} parent=1 // pred_fallthru
      _
    // Predicated region
    $region26: #{tpu_custom_call.1} parent=1 // pred_check
      _
    $region27: #{tpu_custom_call.1} parent=1 // pred_check_branch
      %199 = sbr.rel (0) target = $region29
    $region28: #{tpu_custom_call.1} parent=1 // pred_region
      %s201 = ssub.s32 256, 256
      %202 = vsyncadd [#allocation9], %s201
      %s203 = sshll.u32 [#allocation8], 4
      %s204 = int_to_ptr.vmem [resolvable:$true] %s203
      %209 = dma.vmem_to_hbm [thread:$0]  %s204, 256, %s4, [#allocation9], 64, 64, 4
    $region29: #{tpu_custom_call.1} parent=1 // pred_fallthru
      _
    // Predicated region
    $region30: #{tpu_custom_call.1} parent=1 // pred_check
      _
    $region31: #{tpu_custom_call.1} parent=1 // pred_check_branch
      %211 = sbr.rel (0) target = $region33
    $region32: #{tpu_custom_call.1} parent=1 // pred_region
      %s213 = ssub.s32 256, 256
      %214 = vsyncadd [#allocation9], %s213
      %s215 = sshll.u32 [#allocation10], 4
      %s216 = int_to_ptr.vmem [resolvable:$true] %s215
      %221 = dma.vmem_to_hbm [thread:$0]  %s216, 256, %s5, [#allocation9], 64, 64, 4
    $region33: #{tpu_custom_call.1} parent=1 // pred_fallthru
      _
    // Predicated region
    $region34: #{tpu_custom_call.1} parent=1 // pred_check
      _
    $region35: #{tpu_custom_call.1} parent=1 // pred_check_branch
      %223 = sbr.rel (0) target = $region37
    $region36: #{tpu_custom_call.1} parent=1 // pred_region
      %224 = dma.done [#allocation4], 256
    $region37: #{tpu_custom_call.1} parent=1 // pred_fallthru
      _
    // Predicated region
    $region38: #{tpu_custom_call.1} parent=1 // pred_check
      _
    $region39: #{tpu_custom_call.1} parent=1 // pred_check_branch
      %226 = sbr.rel (0) target = $region41
    $region40: #{tpu_custom_call.1} parent=1 // pred_region
      %227 = dma.done [#allocation9], 256
    $region41: #{tpu_custom_call.1} parent=1 // pred_fallthru
      _
    // Predicated region
    $region42: #{tpu_custom_call.1} parent=1 // pred_check
      _
    $region43: #{tpu_custom_call.1} parent=1 // pred_check_branch
      %229 = sbr.rel (0) target = $region45
    $region44: #{tpu_custom_call.1} parent=1 // pred_region
      %230 = dma.done [#allocation9], 256
    $region45: #{tpu_custom_call.1} parent=1 // pred_fallthru
      _
    %231 = vsyncpa [#allocation3], 1
    %232 = vsyncpa [#allocation6], 1
    %233 = vsyncpa [#allocation4], 1
    %234 = vsyncpa [#allocation9], 1

</llo_original>
